<compile_context>
chip_gen: v5e
topology: v5e:2x2
jax: 0.10.0
libtpu: 0.0.40
codegen_flags: <defaults>
</compile_context>

<pallas_src>
import functools

import jax
import jax.numpy as jnp
from jax import lax
from jax.experimental import pallas as pl
from jax.experimental.pallas import tpu as pltpu


def _round_up(x, m):
    return (x + m - 1) // m * m


# ----------------------------------------------------------------------------
# Kernels
# ----------------------------------------------------------------------------
def _layernorm_kernel(x_ref, a_ref, b_ref, o_ref, *, eps, n):
    """Plain path. x_ref: (tile_rows, F); a_ref/b_ref: (1, F)."""
    x = x_ref[...].astype(jnp.float32)
    # One-pass fused reduction.
    s1 = jnp.sum(x, axis=-1, keepdims=True)
    s2 = jnp.sum(x * x, axis=-1, keepdims=True)
    mean = s1 * jnp.float32(1.0 / n)
    # Unbiased (N-1) variance; clamp against catastrophic cancellation.
    var = jnp.maximum(s2 - s1 * mean, 0.0) * jnp.float32(1.0 / (n - 1))
    inv = pl.reciprocal(jnp.sqrt(var) + jnp.float32(eps), approx=False)
    a = a_ref[...].astype(jnp.float32)
    b = b_ref[...].astype(jnp.float32)
    o_ref[...] = ((x - mean) * inv * a + b).astype(o_ref.dtype)


def _layernorm_packed_kernel(x_ref, a_ref, b_ref, s_ref, o_ref, *, eps, n):
    """Narrow-feature path. Each packed row holds g = lane_width // n
    independent rows of n features.  s_ref is the (lane, lane) block-diagonal
    0/1 matrix; x @ s broadcasts each segment's sum to every lane of that
    segment via the MXU (HIGHEST precision => effectively f32-exact)."""
    x = x_ref[...].astype(jnp.float32)
    seg = s_ref[...]
    s1 = jnp.dot(x, seg, preferred_element_type=jnp.float32,
                 precision=lax.Precision.HIGHEST)
    s2 = jnp.dot(x * x, seg, preferred_element_type=jnp.float32,
                 precision=lax.Precision.HIGHEST)
    mean = s1 * jnp.float32(1.0 / n)
    var = jnp.maximum(s2 - s1 * mean, 0.0) * jnp.float32(1.0 / (n - 1))
    inv = pl.reciprocal(jnp.sqrt(var) + jnp.float32(eps), approx=False)
    a = a_ref[...].astype(jnp.float32)
    b = b_ref[...].astype(jnp.float32)
    o_ref[...] = ((x - mean) * inv * a + b).astype(o_ref.dtype)


# ----------------------------------------------------------------------------
# Tiling / VMEM budgeting
# ----------------------------------------------------------------------------
def _vmem_budgets():
    """Return (tile_budget_bytes, vmem_limit_cap_bytes), generation-aware."""
    phys = None
    try:
        info = pltpu.get_tpu_info()
        phys = getattr(info, "vmem_capacity_bytes", None)
    except Exception:
        phys = None
    if phys is None:
        phys = 64 * 1024 * 1024              # conservative: assume v7x VMEM
    if phys >= 96 * 1024 * 1024:             # v5e / v6e: 128 MiB per TC
        return 56 * 1024 * 1024, 96 * 1024 * 1024
    # v7x: 64 MiB physical; leave headroom for compiler scratch / semaphores.
    return 26 * 1024 * 1024, 52 * 1024 * 1024


def _pick_tile_rows(rows, lane_width, dtype, tile_budget):
    itemsize = jnp.dtype(dtype).itemsize
    # Sublane packing: 8 rows/vreg for 4-byte, 16 for 2-byte, 32 for 1-byte.
    sublane = max(8, 32 // max(itemsize, 1))
    # Per-row VMEM cost: double-buffered input + double-buffered output
    # + ~2 f32-sized intermediates inside the kernel (one-pass reduction).
    bytes_per_row = lane_width * (2 * itemsize + 2 * itemsize + 2 * 4)
    vmem_cap = max(sublane, (tile_budget // bytes_per_row) // sublane * sublane)
    # Target >= ~4 MiB of input per grid step to amortize the ~0.35 us
    # per-step overhead (no hard row cap).
    target = _round_up(pl.cdiv(4 * 1024 * 1024, lane_width * itemsize), sublane)
    tile = int(min(vmem_cap, max(target, sublane)))
    # Megacore: keep at least 2 row blocks when there is non-trivial work so
    # the "parallel" grid axis can shard across v7x's 2 TensorCores.
    if rows > 2 * sublane:
        tile = min(tile, _round_up(pl.cdiv(rows, 2), sublane))
    else:
        tile = min(tile, _round_up(rows, sublane))
    # Prefer an even number of blocks so both cores finish together.
    nblocks = pl.cdiv(rows, tile)
    if nblocks > 1 and nblocks % 2 == 1:
        tile = max(sublane, _round_up(pl.cdiv(rows, nblocks + 1), sublane))
    return int(tile)


def _call_pallas(kernel, x2, consts_and_specs, rows, lane_width, tile_rows):
    tile_budget, vmem_cap = _vmem_budgets()
    tile = tile_rows if tile_rows is not None else _pick_tile_rows(
        rows, lane_width, x2.dtype, tile_budget)
    grid = (pl.cdiv(rows, tile),)
    itemsize = jnp.dtype(x2.dtype).itemsize
    # Double-buffered in/out + f32 temps for one tile (no extra 2x).
    tile_buf_bytes = tile * lane_width * (2 * itemsize + 2 * itemsize + 2 * 4)
    vmem_limit = int(min(vmem_cap,
                         max(32 * 1024 * 1024,
                             tile_buf_bytes + 8 * 1024 * 1024)))
    consts = [c for c, _ in consts_and_specs]
    const_specs = [s for _, s in consts_and_specs]
    return pl.pallas_call(
        kernel,
        out_shape=jax.ShapeDtypeStruct((rows, lane_width), x2.dtype),
        grid_spec=pltpu.PrefetchScalarGridSpec(
            num_scalar_prefetch=0,
            grid=grid,
            in_specs=[pl.BlockSpec((tile, lane_width), lambda i: (i, 0))]
                     + const_specs,
            out_specs=pl.BlockSpec((tile, lane_width), lambda i: (i, 0)),
        ),
        compiler_params=pltpu.CompilerParams(
            dimension_semantics=("parallel",),
            vmem_limit_bytes=vmem_limit,
        ),
    )(x2, *consts)


# ----------------------------------------------------------------------------
# Public wrapper
# ----------------------------------------------------------------------------
def layernorm(x, a_2, b_2, eps=1e-6, *, tile_rows=None):
    """x: (..., features); a_2, b_2: (features,).
    Matches torch: a_2 * (x - mean) / (std_unbiased + eps) + b_2."""
    orig_shape = x.shape
    features = int(orig_shape[-1])
    assert features >= 2, "unbiased std (torch.std default) requires features >= 2"
    rows = 1
    for s in orig_shape[:-1]:
        rows *= int(s)
    x2 = x.reshape(rows, features)
    a2 = a_2.reshape(1, features)
    b2 = b_2.reshape(1, features)

    # Narrow-feature path: repack groups of rows into the 128-lane dimension
    # so HBM loads/stores stay lane-dense (biggest measured store-path lever).
    pack = 0
    if features < 128 and 128 % features == 0:
        g = 128 // features
        if rows >= g and rows % g == 0:
            pack = g
    if pack > 1:
        lane_width = features * pack            # == 128
        rows_p = rows // pack
        xp = x2.reshape(rows_p, lane_width)     # free row-major reinterpretation
        ap = jnp.tile(a2, (1, pack))
        bp = jnp.tile(b2, (1, pack))
        lane_seg = jnp.arange(lane_width, dtype=jnp.int32) // features
        seg_mat = (lane_seg[:, None] == lane_seg[None, :]).astype(jnp.float32)
        kernel = functools.partial(_layernorm_packed_kernel, eps=eps, n=features)
        consts = [
            (ap, pl.BlockSpec((1, lane_width), lambda i: (0, 0))),
            (bp, pl.BlockSpec((1, lane_width), lambda i: (0, 0))),
            (seg_mat, pl.BlockSpec((lane_width, lane_width), lambda i: (0, 0))),
        ]
        try:
            out = _call_pallas(kernel, xp, consts, rows_p, lane_width, tile_rows)
            return out.reshape(orig_shape)
        except Exception:
            # Safety net: fall back to the plain (narrow-lane) path if the
            # packed MXU path fails to lower on this backend.
            pass

    kernel = functools.partial(_layernorm_kernel, eps=eps, n=features)
    consts = [
        (a2, pl.BlockSpec((1, features), lambda i: (0, 0))),
        (b2, pl.BlockSpec((1, features), lambda i: (0, 0))),
    ]
    out = _call_pallas(kernel, x2, consts, rows, features, tile_rows)
    return out.reshape(orig_shape)


def layernorm_ref(x, a_2, b_2, eps=1e-6):
    xf = x.astype(jnp.float32)
    mean = jnp.mean(xf, axis=-1, keepdims=True)
    d = xf - mean
    n = xf.shape[-1]
    std = jnp.sqrt(jnp.sum(d * d, axis=-1, keepdims=True) / (n - 1))
    return (a_2 * d / (std + eps) + b_2).astype(x.dtype)


if __name__ == "__main__":
    key = jax.random.PRNGKey(0)
    k1, k2, k3, k4 = jax.random.split(key, 4)

    # Case 1: module-sized narrow features (hidden=32) -> lane-packed path.
    batch, seq, hidden = 4, 8, 32
    x1 = jax.random.normal(k1, (batch, seq, hidden), dtype=jnp.float32)
    a1 = jnp.ones((hidden,), dtype=jnp.float32)    # nn.Parameter(torch.ones)
    b1 = jnp.zeros((hidden,), dtype=jnp.float32)   # nn.Parameter(torch.zeros)
    out1 = jax.block_until_ready(layernorm(x1, a1, b1))
    ref1 = layernorm_ref(x1, a1, b1)
    assert out1.shape == x1.shape
    assert jnp.allclose(out1, ref1, atol=1e-5, rtol=1e-5), "mismatch (packed path)"

    # Case 2: wide features (multiple of 128) -> plain lane-dense path,
    # with non-trivial scale/bias to exercise the affine part.
    x2_in = jax.random.normal(k2, (2, 16, 256), dtype=jnp.float32)
    a2_in = 1.0 + 0.1 * jax.random.normal(k3, (256,), dtype=jnp.float32)
    b2_in = 0.1 * jax.random.normal(k4, (256,), dtype=jnp.float32)
    out2 = jax.block_until_ready(layernorm(x2_in, a2_in, b2_in))
    ref2 = layernorm_ref(x2_in, a2_in, b2_in)
    assert out2.shape == x2_in.shape
    assert jnp.allclose(out2, ref2, atol=1e-5, rtol=1e-5), "mismatch (plain path)"

    print("KERNEL_OK")
</pallas_src>

<mosaic_0001>
module attributes {stable_mosaic.version = 11 : i64} {
  func.func @_layernorm_packed_kernel(%arg0: i32, %arg1: memref<8x128xf32, #tpu.memory_space<vmem>>, %arg2: memref<1x128xf32, #tpu.memory_space<vmem>>, %arg3: memref<1x128xf32, #tpu.memory_space<vmem>>, %arg4: memref<128x128xf32, #tpu.memory_space<vmem>>, %arg5: memref<8x128xf32, #tpu.memory_space<vmem>>) attributes {dimension_semantics = [#tpu.dimension_semantics<parallel>], iteration_bounds = array<i64: 1>, scalar_prefetch = 0 : i64, scratch_operands = 0 : i64, tpu.core_type = #tpu.core_type<tc>, window_params = [{transform_indices = @transform_0, window_bounds = array<i64: 8, 128>}, {pipeline_mode = #tpu.pipeline_mode<synchronous>, transform_indices = @transform_1, window_bounds = array<i64: 1, 128>}, {pipeline_mode = #tpu.pipeline_mode<synchronous>, transform_indices = @transform_2, window_bounds = array<i64: 1, 128>}, {pipeline_mode = #tpu.pipeline_mode<synchronous>, transform_indices = @transform_3, window_bounds = array<i64: 128, 128>}, {transform_indices = @transform_4, window_bounds = array<i64: 8, 128>}]} {
    %c0 = arith.constant 0 : index
    %c0_0 = arith.constant 0 : index
    %0 = vector.load %arg1[%c0, %c0_0] : memref<8x128xf32, #tpu.memory_space<vmem>>, vector<8x128xf32>
    %c0_1 = arith.constant 0 : index
    %c0_2 = arith.constant 0 : index
    %1 = vector.load %arg4[%c0_1, %c0_2] : memref<128x128xf32, #tpu.memory_space<vmem>>, vector<128x128xf32>
    %cst = arith.constant dense<0.000000e+00> : vector<8x128xf32>
    %2 = tpu.matmul %0, %1, %cst {dimension_numbers = #tpu.dot_dimension_numbers<[1], [0], [0], [1], [0, 0, 1, 1], [], []>, precision = #tpu.contract_precision<fp32>} : vector<8x128xf32>, vector<128x128xf32>, vector<8x128xf32> -> vector<8x128xf32>
    %3 = arith.mulf %0, %0 : vector<8x128xf32>
    %cst_3 = arith.constant dense<0.000000e+00> : vector<8x128xf32>
    %4 = tpu.matmul %3, %1, %cst_3 {dimension_numbers = #tpu.dot_dimension_numbers<[1], [0], [0], [1], [0, 0, 1, 1], [], []>, precision = #tpu.contract_precision<fp32>} : vector<8x128xf32>, vector<128x128xf32>, vector<8x128xf32> -> vector<8x128xf32>
    %cst_4 = arith.constant 3.125000e-02 : f32
    %5 = vector.broadcast %cst_4 : f32 to vector<8x128xf32>
    %6 = arith.mulf %2, %5 : vector<8x128xf32>
    %7 = arith.mulf %2, %6 : vector<8x128xf32>
    %8 = arith.subf %4, %7 : vector<8x128xf32>
    %cst_5 = arith.constant 0.000000e+00 : f32
    %9 = vector.broadcast %cst_5 : f32 to vector<8x128xf32>
    %10 = arith.maximumf %8, %9 : vector<8x128xf32>
    %cst_6 = arith.constant 0.0322580636 : f32
    %11 = vector.broadcast %cst_6 : f32 to vector<8x128xf32>
    %12 = arith.mulf %10, %11 : vector<8x128xf32>
    %13 = math.sqrt %12 : vector<8x128xf32>
    %cst_7 = arith.constant 9.99999997E-7 : f32
    %14 = vector.broadcast %cst_7 : f32 to vector<8x128xf32>
    %15 = arith.addf %13, %14 : vector<8x128xf32>
    %16 = tpu.reciprocal %15 : vector<8x128xf32> -> vector<8x128xf32>
    %c0_8 = arith.constant 0 : index
    %c0_9 = arith.constant 0 : index
    %17 = vector.load %arg2[%c0_8, %c0_9] : memref<1x128xf32, #tpu.memory_space<vmem>>, vector<1x128xf32>
    %c0_10 = arith.constant 0 : index
    %c0_11 = arith.constant 0 : index
    %18 = vector.load %arg3[%c0_10, %c0_11] : memref<1x128xf32, #tpu.memory_space<vmem>>, vector<1x128xf32>
    %19 = arith.subf %0, %6 : vector<8x128xf32>
    %20 = arith.mulf %19, %16 : vector<8x128xf32>
    %21 = vector.broadcast %17 : vector<1x128xf32> to vector<8x128xf32>
    %22 = arith.mulf %20, %21 : vector<8x128xf32>
    %23 = vector.broadcast %18 : vector<1x128xf32> to vector<8x128xf32>
    %24 = arith.addf %22, %23 : vector<8x128xf32>
    %c0_12 = arith.constant 0 : index
    %c0_13 = arith.constant 0 : index
    %25 = vector.load %arg5[%c0_12, %c0_13] : memref<8x128xf32, #tpu.memory_space<vmem>>, vector<8x128xf32>
    tpu.vector_store %arg5[%c0_12, %c0_13], %24 {strides = array<i32>} : memref<8x128xf32, #tpu.memory_space<vmem>>, vector<8x128xf32>,
    return
  }
  func.func @transform_0(%arg0: i32) -> (i32, i32) {
    %c0_i32 = arith.constant 0 : i32
    %c0_i32_0 = arith.constant 0 : i32
    return %arg0, %c0_i32 : i32, i32
  }
  func.func @transform_1(%arg0: i32) -> (i32, i32) {
    %c0_i32 = arith.constant 0 : i32
    %c0_i32_0 = arith.constant 0 : i32
    %c0_i32_1 = arith.constant 0 : i32
    return %c0_i32, %c0_i32_0 : i32, i32
  }
  func.func @transform_2(%arg0: i32) -> (i32, i32) {
    %c0_i32 = arith.constant 0 : i32
    %c0_i32_0 = arith.constant 0 : i32
    %c0_i32_1 = arith.constant 0 : i32
    return %c0_i32, %c0_i32_0 : i32, i32
  }
  func.func @transform_3(%arg0: i32) -> (i32, i32) {
    %c0_i32 = arith.constant 0 : i32
    %c0_i32_0 = arith.constant 0 : i32
    %c0_i32_1 = arith.constant 0 : i32
    return %c0_i32, %c0_i32_0 : i32, i32
  }
  func.func @transform_4(%arg0: i32) -> (i32, i32) {
    %c0_i32 = arith.constant 0 : i32
    %c0_i32_0 = arith.constant 0 : i32
    return %arg0, %c0_i32 : i32, i32
  }
}

module attributes {stable_mosaic.version = 11 : i64} {
  func.func @_layernorm_kernel(%arg0: i32, %arg1: memref<16x32xf32, #tpu.memory_space<vmem>>, %arg2: memref<1x32xf32, #tpu.memory_space<vmem>>, %arg3: memref<1x32xf32, #tpu.memory_space<vmem>>, %arg4: memref<16x32xf32, #tpu.memory_space<vmem>>) attributes {dimension_semantics = [#tpu.dimension_semantics<parallel>], iteration_bounds = array<i64: 2>, scalar_prefetch = 0 : i64, scratch_operands = 0 : i64, tpu.core_type = #tpu.core_type<tc>, window_params = [{transform_indices = @transform_0, window_bounds = array<i64: 16, 32>}, {pipeline_mode = #tpu.pipeline_mode<synchronous>, transform_indices = @transform_1, window_bounds = array<i64: 1, 32>}, {pipeline_mode = #tpu.pipeline_mode<synchronous>, transform_indices = @transform_2, window_bounds = array<i64: 1, 32>}, {transform_indices = @transform_3, window_bounds = array<i64: 16, 32>}]} {
    %c0 = arith.constant 0 : index
    %c0_0 = arith.constant 0 : index
    %0 = vector.load %arg1[%c0, %c0_0] : memref<16x32xf32, #tpu.memory_space<vmem>>, vector<16x32xf32>
    %cst = arith.constant dense<0.000000e+00> : vector<16xf32>
    %1 = vector.multi_reduction <add>, %0, %cst [1] : vector<16x32xf32> to vector<16xf32>
    %2 = vector.shape_cast %1 : vector<16xf32> to vector<16x1xf32>
    %3 = arith.mulf %0, %0 : vector<16x32xf32>
    %cst_1 = arith.constant dense<0.000000e+00> : vector<16xf32>
    %4 = vector.multi_reduction <add>, %3, %cst_1 [1] : vector<16x32xf32> to vector<16xf32>
    %5 = vector.shape_cast %4 : vector<16xf32> to vector<16x1xf32>
    %cst_2 = arith.constant 3.125000e-02 : f32
    %6 = vector.broadcast %cst_2 : f32 to vector<16x1xf32>
    %7 = arith.mulf %2, %6 : vector<16x1xf32>
    %8 = arith.mulf %2, %7 : vector<16x1xf32>
    %9 = arith.subf %5, %8 : vector<16x1xf32>
    %cst_3 = arith.constant 0.000000e+00 : f32
    %10 = vector.broadcast %cst_3 : f32 to vector<16x1xf32>
    %11 = arith.maximumf %9, %10 : vector<16x1xf32>
    %cst_4 = arith.constant 0.0322580636 : f32
    %12 = vector.broadcast %cst_4 : f32 to vector<16x1xf32>
    %13 = arith.mulf %11, %12 : vector<16x1xf32>
    %14 = math.sqrt %13 : vector<16x1xf32>
    %cst_5 = arith.constant 9.99999997E-7 : f32
    %15 = vector.broadcast %cst_5 : f32 to vector<16x1xf32>
    %16 = arith.addf %14, %15 : vector<16x1xf32>
    %17 = tpu.reciprocal %16 : vector<16x1xf32> -> vector<16x1xf32>
    %c0_6 = arith.constant 0 : index
    %c0_7 = arith.constant 0 : index
    %18 = vector.load %arg2[%c0_6, %c0_7] : memref<1x32xf32, #tpu.memory_space<vmem>>, vector<1x32xf32>
    %c0_8 = arith.constant 0 : index
    %c0_9 = arith.constant 0 : index
    %19 = vector.load %arg3[%c0_8, %c0_9] : memref<1x32xf32, #tpu.memory_space<vmem>>, vector<1x32xf32>
    %20 = vector.broadcast %7 : vector<16x1xf32> to vector<16x32xf32>
    %21 = arith.subf %0, %20 : vector<16x32xf32>
    %22 = vector.broadcast %17 : vector<16x1xf32> to vector<16x32xf32>
    %23 = arith.mulf %21, %22 : vector<16x32xf32>
    %24 = vector.broadcast %18 : vector<1x32xf32> to vector<16x32xf32>
    %25 = arith.mulf %23, %24 : vector<16x32xf32>
    %26 = vector.broadcast %19 : vector<1x32xf32> to vector<16x32xf32>
    %27 = arith.addf %25, %26 : vector<16x32xf32>
    %c0_10 = arith.constant 0 : index
    %c0_11 = arith.constant 0 : index
    %28 = vector.load %arg4[%c0_10, %c0_11] : memref<16x32xf32, #tpu.memory_space<vmem>>, vector<16x32xf32>
    tpu.vector_store %arg4[%c0_10, %c0_11], %27 {strides = array<i32>} : memref<16x32xf32, #tpu.memory_space<vmem>>, vector<16x32xf32>,
    return
  }
  func.func @transform_0(%arg0: i32) -> (i32, i32) {
    %c0_i32 = arith.constant 0 : i32
    %c0_i32_0 = arith.constant 0 : i32
    return %arg0, %c0_i32 : i32, i32
  }
  func.func @transform_1(%arg0: i32) -> (i32, i32) {
    %c0_i32 = arith.constant 0 : i32
    %c0_i32_0 = arith.constant 0 : i32
    %c0_i32_1 = arith.constant 0 : i32
    return %c0_i32, %c0_i32_0 : i32, i32
  }
  func.func @transform_2(%arg0: i32) -> (i32, i32) {
    %c0_i32 = arith.constant 0 : i32
    %c0_i32_0 = arith.constant 0 : i32
    %c0_i32_1 = arith.constant 0 : i32
    return %c0_i32, %c0_i32_0 : i32, i32
  }
  func.func @transform_3(%arg0: i32) -> (i32, i32) {
    %c0_i32 = arith.constant 0 : i32
    %c0_i32_0 = arith.constant 0 : i32
    return %arg0, %c0_i32 : i32, i32
  }
}

</mosaic_0001>

<llo_original>
// kernel: tpu_custom_call.1
$region0: #{tpu_custom_call.1}
  #allocation0 [shape = 'u32[]', space=smem, size = 0x4, offset = 0x4, fixed_abs, tag = 'smem constant byte address 0x4 - core index']
  #allocation1 [shape = 'u32[72,128]{1,0:T(1,128)}', space=vmem, size = 0x9000, scoped, tag = 'internal scratch']
  %s0 = inlined_call_operand.hbm [shape: f32[8,128], index: 0, kind: input, shape index: {}]
  %s1 = inlined_call_operand.hbm [shape: f32[1,128], index: 1, kind: input, shape index: {}]
  %s2 = inlined_call_operand.vmem [shape: f32[1,128], index: 2, kind: input, shape index: {}]
  %s3 = inlined_call_operand.hbm [shape: f32[128,128], index: 3, kind: input, shape index: {}]
  %s4 = inlined_call_operand.hbm [shape: f32[8,128], index: 4, kind: output, shape index: {}]
  %s5 = sld [smem:[#allocation0]]
  $region38: #{tpu_custom_call.1} parent=0
    _
  %s7 = ssub.s32 1, %s5
  %s8 = scalar_select 0, %s7, %s5
  $region1: #{tpu_custom_call.1} parent=0
    #allocation2 [shape = 'u8[4096]{0}', space=vmem, size = 0x1000, scoped, tag = 'input window, operand 0, single buffered']
    #allocation3 [shape = 's32[1]{0}', space=sflag, size = 0x4, scoped, tag = 'scoped memory for tpu_custom_call.1']
    #allocation4 [shape = 's32[1]{0}', space=sflag, size = 0x4, scoped, tag = 'scoped memory for tpu_custom_call.1']
    #allocation5 [shape = 'u8[512]{0}', space=vmem, size = 0x400, scoped, tag = 'input window, operand 1, single buffered']
    #allocation6 [shape = 's32[1]{0}', space=sflag, size = 0x4, scoped, tag = 'scoped memory for tpu_custom_call.1']
    #allocation7 [shape = 'u8[65536]{0}', space=vmem, size = 0x10000, scoped, tag = 'input window, operand 3, single buffered']
    #allocation8 [shape = 'u8[4096]{0}', space=vmem, size = 0x1000, scoped, tag = 'output window, operand 0, single buffered']
    %9 = vsyncpa [#allocation3], 0
    %10 = vsyncpa [#allocation6], 0
    %11 = vsyncpa [#allocation4], 0
    // Predicated region
    $region2: #{tpu_custom_call.1} parent=1 // pred_check
      _
    $region3: #{tpu_custom_call.1} parent=1 // pred_check_branch
      %13 = sbr.rel (0) target = $region5
    $region4: #{tpu_custom_call.1} parent=1 // pred_region
      %15 = vsyncadd [#allocation3], 0
      %s17 = sshll.u32 %s0, 4
      %s18 = int_to_ptr.hbm [resolvable:$true] %s17
      %s19 = sshll.u32 [#allocation2], 4
      %s20 = int_to_ptr.vmem [resolvable:$true] %s19
      %22 = dma.hbm_to_vmem [thread:$0]  %s18, 128, %s20, [#allocation3]
    $region5: #{tpu_custom_call.1} parent=1 // pred_fallthru
      _
    // Predicated region
    $region6: #{tpu_custom_call.1} parent=1 // pred_check
      _
    $region7: #{tpu_custom_call.1} parent=1 // pred_check_branch
      %24 = sbr.rel (0) target = $region9
    $region8: #{tpu_custom_call.1} parent=1 // pred_region
      %26 = vsyncadd [#allocation6], 0
      %s28 = sshll.u32 %s1, 4
      %s29 = int_to_ptr.hbm [resolvable:$true] %s28
      %s30 = sshll.u32 [#allocation5], 4
      %s31 = int_to_ptr.vmem [resolvable:$true] %s30
      %33 = dma.hbm_to_vmem [thread:$0]  %s29, 16, %s31, [#allocation6]
    $region9: #{tpu_custom_call.1} parent=1 // pred_fallthru
      _
    // Predicated region
    $region10: #{tpu_custom_call.1} parent=1 // pred_check
      _
    $region11: #{tpu_custom_call.1} parent=1 // pred_check_branch
      %35 = sbr.rel (0) target = $region13
    $region12: #{tpu_custom_call.1} parent=1 // pred_region
      _
    $region13: #{tpu_custom_call.1} parent=1 // pred_fallthru
      _
    // Predicated region
    $region14: #{tpu_custom_call.1} parent=1 // pred_check
      _
    $region15: #{tpu_custom_call.1} parent=1 // pred_check_branch
      %37 = sbr.rel (0) target = $region17
    $region16: #{tpu_custom_call.1} parent=1 // pred_region
      %39 = vsyncadd [#allocation6], 0
      %s40 = sshll.u32 %s3, 4
      %s41 = int_to_ptr.hbm [resolvable:$true] %s40
      %s42 = sshll.u32 [#allocation7], 4
      %s43 = int_to_ptr.vmem [resolvable:$true] %s42
      %48 = dma.hbm_to_vmem [thread:$0]  %s41, 2048, %s43, [#allocation6], 128, 128, 8
    $region17: #{tpu_custom_call.1} parent=1 // pred_fallthru
      _
    // Predicated region
    $region18: #{tpu_custom_call.1} parent=1 // pred_check
      _
    $region19: #{tpu_custom_call.1} parent=1 // pred_check_branch
      %50 = sbr.rel (0) target = $region21
    $region20: #{tpu_custom_call.1} parent=1 // pred_region
      %52 = dma.done [#allocation3], 128
    $region21: #{tpu_custom_call.1} parent=1 // pred_fallthru
      _
    // Predicated region
    $region22: #{tpu_custom_call.1} parent=1 // pred_check
      _
    $region23: #{tpu_custom_call.1} parent=1 // pred_check_branch
      %54 = sbr.rel (0) target = $region25
    $region24: #{tpu_custom_call.1} parent=1 // pred_region
      %56 = dma.done [#allocation6], 16
    $region25: #{tpu_custom_call.1} parent=1 // pred_fallthru
      _
    // Predicated region
    $region26: #{tpu_custom_call.1} parent=1 // pred_check
      _
    $region27: #{tpu_custom_call.1} parent=1 // pred_check_branch
      %58 = sbr.rel (0) target = $region29
    $region28: #{tpu_custom_call.1} parent=1 // pred_region
      %60 = dma.done [#allocation6], 2048
    $region29: #{tpu_custom_call.1} parent=1 // pred_fallthru
      _
    %v61 = vld [vmem:[#allocation2] sm:$0xff]
    %v62 = vld [vmem:[#allocation7] sm:$0xff]
    %v63 = vld [vmem:[#allocation7 + $0x8] sm:$0xff]
    %v64 = vld [vmem:[#allocation7 + $0x10] sm:$0xff]
    %v65 = vld [vmem:[#allocation7 + $0x18] sm:$0xff]
    %v66 = vld [vmem:[#allocation7 + $0x20] sm:$0xff]
    %v67 = vld [vmem:[#allocation7 + $0x28] sm:$0xff]
    %v68 = vld [vmem:[#allocation7 + $0x30] sm:$0xff]
    %v69 = vld [vmem:[#allocation7 + $0x38] sm:$0xff]
    %v70 = vld [vmem:[#allocation7 + $0x40] sm:$0xff]
    %v71 = vld [vmem:[#allocation7 + $0x48] sm:$0xff]
    %v72 = vld [vmem:[#allocation7 + $0x50] sm:$0xff]
    %v73 = vld [vmem:[#allocation7 + $0x58] sm:$0xff]
    %v74 = vld [vmem:[#allocation7 + $0x60] sm:$0xff]
    %v75 = vld [vmem:[#allocation7 + $0x68] sm:$0xff]
    %v76 = vld [vmem:[#allocation7 + $0x70] sm:$0xff]
    %v77 = vld [vmem:[#allocation7 + $0x78] sm:$0xff]
    %v78 = vand.u32 %v77, 4294901760
    %79 = vmatpush.msra.mxu0 %v78
    %v80 = vand.u32 %v76, 4294901760
    %81 = vmatpush.msra.mxu0 %v80
    %v82 = vand.u32 %v75, 4294901760
    %83 = vmatpush.msra.mxu0 %v82
    %v84 = vand.u32 %v74, 4294901760
    %85 = vmatpush.msra.mxu0 %v84
    %v86 = vand.u32 %v73, 4294901760
    %87 = vmatpush.msra.mxu0 %v86
    %v88 = vand.u32 %v72, 4294901760
    %89 = vmatpush.msra.mxu0 %v88
    %v90 = vand.u32 %v71, 4294901760
    %91 = vmatpush.msra.mxu0 %v90
    %v92 = vand.u32 %v70, 4294901760
    %93 = vmatpush.msra.mxu0 %v92
    %v94 = vand.u32 %v69, 4294901760
    %95 = vmatpush.msra.mxu0 %v94
    %v96 = vand.u32 %v68, 4294901760
    %97 = vmatpush.msra.mxu0 %v96
    %v98 = vand.u32 %v67, 4294901760
    %99 = vmatpush.msra.mxu0 %v98
    %v100 = vand.u32 %v66, 4294901760
    %101 = vmatpush.msra.mxu0 %v100
    %v102 = vand.u32 %v65, 4294901760
    %103 = vmatpush.msra.mxu0 %v102
    %v104 = vand.u32 %v64, 4294901760
    %105 = vmatpush.msra.mxu0 %v104
    %v106 = vand.u32 %v63, 4294901760
    %107 = vmatpush.msra.mxu0 %v106
    %v108 = vand.u32 %v62, 4294901760
    %109 = vmatpush.msra.mxu0 %v108
    %v110 = vand.u32 %v61, 4294901760
    %v111 = vsub.f32 %v61, %v110
    %v112 = vand.u32 %v111, 4294901760
    %v113 = vsub.f32 %v111, %v112
    %v114 = vand.u32 %v113, 4294901760
    %115 = vmatmul.f32.gmra.mxu0 %v114
    %v116 = vpop.f32.mrf.mxu0
    %v117 = vadd.f32 0.0, %v116
    %118 = vdwg.mxu0
    %v119 = vand.u32 %v77, 4294901760
    %v120 = vsub.f32 %v77, %v119
    %v121 = vand.u32 %v120, 4294901760
    %v122 = vsub.f32 %v120, %v121
    %v123 = vand.u32 %v122, 4294901760
    %124 = vmatpush.msra.mxu0 %v123
    %v125 = vand.u32 %v76, 4294901760
    %v126 = vsub.f32 %v76, %v125
    %v127 = vand.u32 %v126, 4294901760
    %v128 = vsub.f32 %v126, %v127
    %v129 = vand.u32 %v128, 4294901760
    %130 = vmatpush.msra.mxu0 %v129
    %v131 = vand.u32 %v75, 4294901760
    %v132 = vsub.f32 %v75, %v131
    %v133 = vand.u32 %v132, 4294901760
    %v134 = vsub.f32 %v132, %v133
    %v135 = vand.u32 %v134, 4294901760
    %136 = vmatpush.msra.mxu0 %v135
    %v137 = vand.u32 %v74, 4294901760
    %v138 = vsub.f32 %v74, %v137
    %v139 = vand.u32 %v138, 4294901760
    %v140 = vsub.f32 %v138, %v139
    %v141 = vand.u32 %v140, 4294901760
    %142 = vmatpush.msra.mxu0 %v141
    %v143 = vand.u32 %v73, 4294901760
    %v144 = vsub.f32 %v73, %v143
    %v145 = vand.u32 %v144, 4294901760
    %v146 = vsub.f32 %v144, %v145
    %v147 = vand.u32 %v146, 4294901760
    %148 = vmatpush.msra.mxu0 %v147
    %v149 = vand.u32 %v72, 4294901760
    %v150 = vsub.f32 %v72, %v149
    %v151 = vand.u32 %v150, 4294901760
    %v152 = vsub.f32 %v150, %v151
    %v153 = vand.u32 %v152, 4294901760
    %154 = vmatpush.msra.mxu0 %v153
    %v155 = vand.u32 %v71, 4294901760
    %v156 = vsub.f32 %v71, %v155
    %v157 = vand.u32 %v156, 4294901760
    %v158 = vsub.f32 %v156, %v157
    %v159 = vand.u32 %v158, 4294901760
    %160 = vmatpush.msra.mxu0 %v159
    %v161 = vand.u32 %v70, 4294901760
    %v162 = vsub.f32 %v70, %v161
    %v163 = vand.u32 %v162, 4294901760
    %v164 = vsub.f32 %v162, %v163
    %v165 = vand.u32 %v164, 4294901760
    %166 = vmatpush.msra.mxu0 %v165
    %v167 = vand.u32 %v69, 4294901760
    %v168 = vsub.f32 %v69, %v167
    %v169 = vand.u32 %v168, 4294901760
    %v170 = vsub.f32 %v168, %v169
    %v171 = vand.u32 %v170, 4294901760
    %172 = vmatpush.msra.mxu0 %v171
    %v173 = vand.u32 %v68, 4294901760
    %v174 = vsub.f32 %v68, %v173
    %v175 = vand.u32 %v174, 4294901760
    %v176 = vsub.f32 %v174, %v175
    %v177 = vand.u32 %v176, 4294901760
    %178 = vmatpush.msra.mxu0 %v177
    %v179 = vand.u32 %v67, 4294901760
    %v180 = vsub.f32 %v67, %v179
    %v181 = vand.u32 %v180, 4294901760
    %v182 = vsub.f32 %v180, %v181
    %v183 = vand.u32 %v182, 4294901760
    %184 = vmatpush.msra.mxu0 %v183
    %v185 = vand.u32 %v66, 4294901760
    %v186 = vsub.f32 %v66, %v185
    %v187 = vand.u32 %v186, 4294901760
    %v188 = vsub.f32 %v186, %v187
    %v189 = vand.u32 %v188, 4294901760
    %190 = vmatpush.msra.mxu0 %v189
    %v191 = vand.u32 %v65, 4294901760
    %v192 = vsub.f32 %v65, %v191
    %v193 = vand.u32 %v192, 4294901760
    %v194 = vsub.f32 %v192, %v193
    %v195 = vand.u32 %v194, 4294901760
    %196 = vmatpush.msra.mxu0 %v195
    %v197 = vand.u32 %v64, 4294901760
    %v198 = vsub.f32 %v64, %v197
    %v199 = vand.u32 %v198, 4294901760
    %v200 = vsub.f32 %v198, %v199
    %v201 = vand.u32 %v200, 4294901760
    %202 = vmatpush.msra.mxu0 %v201
    %v203 = vand.u32 %v63, 4294901760
    %v204 = vsub.f32 %v63, %v203
    %v205 = vand.u32 %v204, 4294901760
    %v206 = vsub.f32 %v204, %v205
    %v207 = vand.u32 %v206, 4294901760
    %208 = vmatpush.msra.mxu0 %v207
    %v209 = vand.u32 %v62, 4294901760
    %v210 = vsub.f32 %v62, %v209
    %v211 = vand.u32 %v210, 4294901760
    %v212 = vsub.f32 %v210, %v211
    %v213 = vand.u32 %v212, 4294901760
    %214 = vmatpush.msra.mxu0 %v213
    %v215 = vand.u32 %v61, 4294901760
    %216 = vmatmul.f32.gmra.mxu0 %v215
    %v217 = vpop.f32.mrf.mxu0
    %v218 = vadd.f32 %v117, %v217
    %219 = vdwg.mxu0
    %v220 = vand.u32 %v77, 4294901760
    %v221 = vsub.f32 %v77, %v220
    %222 = vmatpush.msra.mxu0 %v221
    %v223 = vand.u32 %v76, 4294901760
    %v224 = vsub.f32 %v76, %v223
    %225 = vmatpush.msra.mxu0 %v224
    %v226 = vand.u32 %v75, 4294901760
    %v227 = vsub.f32 %v75, %v226
    %228 = vmatpush.msra.mxu0 %v227
    %v229 = vand.u32 %v74, 4294901760
    %v230 = vsub.f32 %v74, %v229
    %231 = vmatpush.msra.mxu0 %v230
    %v232 = vand.u32 %v73, 4294901760
    %v233 = vsub.f32 %v73, %v232
    %234 = vmatpush.msra.mxu0 %v233
    %v235 = vand.u32 %v72, 4294901760
    %v236 = vsub.f32 %v72, %v235
    %237 = vmatpush.msra.mxu0 %v236
    %v238 = vand.u32 %v71, 4294901760
    %v239 = vsub.f32 %v71, %v238
    %240 = vmatpush.msra.mxu0 %v239
    %v241 = vand.u32 %v70, 4294901760
    %v242 = vsub.f32 %v70, %v241
    %243 = vmatpush.msra.mxu0 %v242
    %v244 = vand.u32 %v69, 4294901760
    %v245 = vsub.f32 %v69, %v244
    %246 = vmatpush.msra.mxu0 %v245
    %v247 = vand.u32 %v68, 4294901760
    %v248 = vsub.f32 %v68, %v247
    %249 = vmatpush.msra.mxu0 %v248
    %v250 = vand.u32 %v67, 4294901760
    %v251 = vsub.f32 %v67, %v250
    %252 = vmatpush.msra.mxu0 %v251
    %v253 = vand.u32 %v66, 4294901760
    %v254 = vsub.f32 %v66, %v253
    %255 = vmatpush.msra.mxu0 %v254
    %v256 = vand.u32 %v65, 4294901760
    %v257 = vsub.f32 %v65, %v256
    %258 = vmatpush.msra.mxu0 %v257
    %v259 = vand.u32 %v64, 4294901760
    %v260 = vsub.f32 %v64, %v259
    %261 = vmatpush.msra.mxu0 %v260
    %v262 = vand.u32 %v63, 4294901760
    %v263 = vsub.f32 %v63, %v262
    %264 = vmatpush.msra.mxu0 %v263
    %v265 = vand.u32 %v62, 4294901760
    %v266 = vsub.f32 %v62, %v265
    %267 = vmatpush.msra.mxu0 %v266
    %v268 = vand.u32 %v61, 4294901760
    %v269 = vsub.f32 %v61, %v268
    %270 = vmatmul.f32.gmra.mxu0 %v269
    %v271 = vpop.f32.mrf.mxu0
    %v272 = vadd.f32 %v218, %v271
    %273 = vdwg.mxu0
    %v274 = vand.u32 %v77, 4294901760
    %275 = vmatpush.msra.mxu0 %v274
    %v276 = vand.u32 %v76, 4294901760
    %277 = vmatpush.msra.mxu0 %v276
    %v278 = vand.u32 %v75, 4294901760
    %279 = vmatpush.msra.mxu0 %v278
    %v280 = vand.u32 %v74, 4294901760
    %281 = vmatpush.msra.mxu0 %v280
    %v282 = vand.u32 %v73, 4294901760
    %283 = vmatpush.msra.mxu0 %v282
    %v284 = vand.u32 %v72, 4294901760
    %285 = vmatpush.msra.mxu0 %v284
    %v286 = vand.u32 %v71, 4294901760
    %287 = vmatpush.msra.mxu0 %v286
    %v288 = vand.u32 %v70, 4294901760
    %289 = vmatpush.msra.mxu0 %v288
    %v290 = vand.u32 %v69, 4294901760
    %291 = vmatpush.msra.mxu0 %v290
    %v292 = vand.u32 %v68, 4294901760
    %293 = vmatpush.msra.mxu0 %v292
    %v294 = vand.u32 %v67, 4294901760
    %295 = vmatpush.msra.mxu0 %v294
    %v296 = vand.u32 %v66, 4294901760
    %297 = vmatpush.msra.mxu0 %v296
    %v298 = vand.u32 %v65, 4294901760
    %299 = vmatpush.msra.mxu0 %v298
    %v300 = vand.u32 %v64, 4294901760
    %301 = vmatpush.msra.mxu0 %v300
    %v302 = vand.u32 %v63, 4294901760
    %303 = vmatpush.msra.mxu0 %v302
    %v304 = vand.u32 %v62, 4294901760
    %305 = vmatpush.msra.mxu0 %v304
    %v306 = vand.u32 %v61, 4294901760
    %v307 = vsub.f32 %v61, %v306
    %v308 = vand.u32 %v307, 4294901760
    %309 = vmatmul.f32.gmra.mxu0 %v308
    %v310 = vpop.f32.mrf.mxu0
    %v311 = vadd.f32 %v272, %v310
    %312 = vdwg.mxu0
    %v313 = vand.u32 %v77, 4294901760
    %v314 = vsub.f32 %v77, %v313
    %v315 = vand.u32 %v314, 4294901760
    %316 = vmatpush.msra.mxu0 %v315
    %v317 = vand.u32 %v76, 4294901760
    %v318 = vsub.f32 %v76, %v317
    %v319 = vand.u32 %v318, 4294901760
    %320 = vmatpush.msra.mxu0 %v319
    %v321 = vand.u32 %v75, 4294901760
    %v322 = vsub.f32 %v75, %v321
    %v323 = vand.u32 %v322, 4294901760
    %324 = vmatpush.msra.mxu0 %v323
    %v325 = vand.u32 %v74, 4294901760
    %v326 = vsub.f32 %v74, %v325
    %v327 = vand.u32 %v326, 4294901760
    %328 = vmatpush.msra.mxu0 %v327
    %v329 = vand.u32 %v73, 4294901760
    %v330 = vsub.f32 %v73, %v329
    %v331 = vand.u32 %v330, 4294901760
    %332 = vmatpush.msra.mxu0 %v331
    %v333 = vand.u32 %v72, 4294901760
    %v334 = vsub.f32 %v72, %v333
    %v335 = vand.u32 %v334, 4294901760
    %336 = vmatpush.msra.mxu0 %v335
    %v337 = vand.u32 %v71, 4294901760
    %v338 = vsub.f32 %v71, %v337
    %v339 = vand.u32 %v338, 4294901760
    %340 = vmatpush.msra.mxu0 %v339
    %v341 = vand.u32 %v70, 4294901760
    %v342 = vsub.f32 %v70, %v341
    %v343 = vand.u32 %v342, 4294901760
    %344 = vmatpush.msra.mxu0 %v343
    %v345 = vand.u32 %v69, 4294901760
    %v346 = vsub.f32 %v69, %v345
    %v347 = vand.u32 %v346, 4294901760
    %348 = vmatpush.msra.mxu0 %v347
    %v349 = vand.u32 %v68, 4294901760
    %v350 = vsub.f32 %v68, %v349
    %v351 = vand.u32 %v350, 4294901760
    %352 = vmatpush.msra.mxu0 %v351
    %v353 = vand.u32 %v67, 4294901760
    %v354 = vsub.f32 %v67, %v353
    %v355 = vand.u32 %v354, 4294901760
    %356 = vmatpush.msra.mxu0 %v355
    %v357 = vand.u32 %v66, 4294901760
    %v358 = vsub.f32 %v66, %v357
    %v359 = vand.u32 %v358, 4294901760
    %360 = vmatpush.msra.mxu0 %v359
    %v361 = vand.u32 %v65, 4294901760
    %v362 = vsub.f32 %v65, %v361
    %v363 = vand.u32 %v362, 4294901760
    %364 = vmatpush.msra.mxu0 %v363
    %v365 = vand.u32 %v64, 4294901760
    %v366 = vsub.f32 %v64, %v365
    %v367 = vand.u32 %v366, 4294901760
    %368 = vmatpush.msra.mxu0 %v367
    %v369 = vand.u32 %v63, 4294901760
    %v370 = vsub.f32 %v63, %v369
    %v371 = vand.u32 %v370, 4294901760
    %372 = vmatpush.msra.mxu0 %v371
    %v373 = vand.u32 %v62, 4294901760
    %v374 = vsub.f32 %v62, %v373
    %v375 = vand.u32 %v374, 4294901760
    %376 = vmatpush.msra.mxu0 %v375
    %v377 = vand.u32 %v61, 4294901760
    %378 = vmatmul.f32.gmra.mxu0 %v377
    %v379 = vpop.f32.mrf.mxu0
    %v380 = vadd.f32 %v311, %v379
    %381 = vdwg.mxu0
    %v382 = vand.u32 %v77, 4294901760
    %383 = vmatpush.msra.mxu0 %v382
    %v384 = vand.u32 %v76, 4294901760
    %385 = vmatpush.msra.mxu0 %v384
    %v386 = vand.u32 %v75, 4294901760
    %387 = vmatpush.msra.mxu0 %v386
    %v388 = vand.u32 %v74, 4294901760
    %389 = vmatpush.msra.mxu0 %v388
    %v390 = vand.u32 %v73, 4294901760
    %391 = vmatpush.msra.mxu0 %v390
    %v392 = vand.u32 %v72, 4294901760
    %393 = vmatpush.msra.mxu0 %v392
    %v394 = vand.u32 %v71, 4294901760
    %395 = vmatpush.msra.mxu0 %v394
    %v396 = vand.u32 %v70, 4294901760
    %397 = vmatpush.msra.mxu0 %v396
    %v398 = vand.u32 %v69, 4294901760
    %399 = vmatpush.msra.mxu0 %v398
    %v400 = vand.u32 %v68, 4294901760
    %401 = vmatpush.msra.mxu0 %v400
    %v402 = vand.u32 %v67, 4294901760
    %403 = vmatpush.msra.mxu0 %v402
    %v404 = vand.u32 %v66, 4294901760
    %405 = vmatpush.msra.mxu0 %v404
    %v406 = vand.u32 %v65, 4294901760
    %407 = vmatpush.msra.mxu0 %v406
    %v408 = vand.u32 %v64, 4294901760
    %409 = vmatpush.msra.mxu0 %v408
    %v410 = vand.u32 %v63, 4294901760
    %411 = vmatpush.msra.mxu0 %v410
    %v412 = vand.u32 %v62, 4294901760
    %413 = vmatpush.msra.mxu0 %v412
    %v414 = vand.u32 %v61, 4294901760
    %415 = vmatmul.f32.gmra.mxu0 %v414
    %v416 = vpop.f32.mrf.mxu0
    %v417 = vadd.f32 %v380, %v416
    %418 = vdwg.mxu0
    %v419 = vmul.f32 %v61, %v61
    %v420 = vand.u32 %v77, 4294901760
    %421 = vmatpush.msra.mxu0 %v420
    %v422 = vand.u32 %v76, 4294901760
    %423 = vmatpush.msra.mxu0 %v422
    %v424 = vand.u32 %v75, 4294901760
    %425 = vmatpush.msra.mxu0 %v424
    %v426 = vand.u32 %v74, 4294901760
    %427 = vmatpush.msra.mxu0 %v426
    %v428 = vand.u32 %v73, 4294901760
    %429 = vmatpush.msra.mxu0 %v428
    %v430 = vand.u32 %v72, 4294901760
    %431 = vmatpush.msra.mxu0 %v430
    %v432 = vand.u32 %v71, 4294901760
    %433 = vmatpush.msra.mxu0 %v432
    %v434 = vand.u32 %v70, 4294901760
    %435 = vmatpush.msra.mxu0 %v434
    %v436 = vand.u32 %v69, 4294901760
    %437 = vmatpush.msra.mxu0 %v436
    %v438 = vand.u32 %v68, 4294901760
    %439 = vmatpush.msra.mxu0 %v438
    %v440 = vand.u32 %v67, 4294901760
    %441 = vmatpush.msra.mxu0 %v440
    %v442 = vand.u32 %v66, 4294901760
    %443 = vmatpush.msra.mxu0 %v442
    %v444 = vand.u32 %v65, 4294901760
    %445 = vmatpush.msra.mxu0 %v444
    %v446 = vand.u32 %v64, 4294901760
    %447 = vmatpush.msra.mxu0 %v446
    %v448 = vand.u32 %v63, 4294901760
    %449 = vmatpush.msra.mxu0 %v448
    %v450 = vand.u32 %v62, 4294901760
    %451 = vmatpush.msra.mxu0 %v450
    %v452 = vand.u32 %v419, 4294901760
    %v453 = vsub.f32 %v419, %v452
    %v454 = vand.u32 %v453, 4294901760
    %v455 = vsub.f32 %v453, %v454
    %v456 = vand.u32 %v455, 4294901760
    %457 = vmatmul.f32.gmra.mxu0 %v456
    %v458 = vpop.f32.mrf.mxu0
    %v459 = vadd.f32 0.0, %v458
    %460 = vdwg.mxu0
    %v461 = vand.u32 %v77, 4294901760
    %v462 = vsub.f32 %v77, %v461
    %v463 = vand.u32 %v462, 4294901760
    %v464 = vsub.f32 %v462, %v463
    %v465 = vand.u32 %v464, 4294901760
    %466 = vmatpush.msra.mxu0 %v465
    %v467 = vand.u32 %v76, 4294901760
    %v468 = vsub.f32 %v76, %v467
    %v469 = vand.u32 %v468, 4294901760
    %v470 = vsub.f32 %v468, %v469
    %v471 = vand.u32 %v470, 4294901760
    %472 = vmatpush.msra.mxu0 %v471
    %v473 = vand.u32 %v75, 4294901760
    %v474 = vsub.f32 %v75, %v473
    %v475 = vand.u32 %v474, 4294901760
    %v476 = vsub.f32 %v474, %v475
    %v477 = vand.u32 %v476, 4294901760
    %478 = vmatpush.msra.mxu0 %v477
    %v479 = vand.u32 %v74, 4294901760
    %v480 = vsub.f32 %v74, %v479
    %v481 = vand.u32 %v480, 4294901760
    %v482 = vsub.f32 %v480, %v481
    %v483 = vand.u32 %v482, 4294901760
    %484 = vmatpush.msra.mxu0 %v483
    %v485 = vand.u32 %v73, 4294901760
    %v486 = vsub.f32 %v73, %v485
    %v487 = vand.u32 %v486, 4294901760
    %v488 = vsub.f32 %v486, %v487
    %v489 = vand.u32 %v488, 4294901760
    %490 = vmatpush.msra.mxu0 %v489
    %v491 = vand.u32 %v72, 4294901760
    %v492 = vsub.f32 %v72, %v491
    %v493 = vand.u32 %v492, 4294901760
    %v494 = vsub.f32 %v492, %v493
    %v495 = vand.u32 %v494, 4294901760
    %496 = vmatpush.msra.mxu0 %v495
    %v497 = vand.u32 %v71, 4294901760
    %v498 = vsub.f32 %v71, %v497
    %v499 = vand.u32 %v498, 4294901760
    %v500 = vsub.f32 %v498, %v499
    %v501 = vand.u32 %v500, 4294901760
    %502 = vmatpush.msra.mxu0 %v501
    %v503 = vand.u32 %v70, 4294901760
    %v504 = vsub.f32 %v70, %v503
    %v505 = vand.u32 %v504, 4294901760
    %v506 = vsub.f32 %v504, %v505
    %v507 = vand.u32 %v506, 4294901760
    %508 = vmatpush.msra.mxu0 %v507
    %v509 = vand.u32 %v69, 4294901760
    %v510 = vsub.f32 %v69, %v509
    %v511 = vand.u32 %v510, 4294901760
    %v512 = vsub.f32 %v510, %v511
    %v513 = vand.u32 %v512, 4294901760
    %514 = vmatpush.msra.mxu0 %v513
    %v515 = vand.u32 %v68, 4294901760
    %v516 = vsub.f32 %v68, %v515
    %v517 = vand.u32 %v516, 4294901760
    %v518 = vsub.f32 %v516, %v517
    %v519 = vand.u32 %v518, 4294901760
    %520 = vmatpush.msra.mxu0 %v519
    %v521 = vand.u32 %v67, 4294901760
    %v522 = vsub.f32 %v67, %v521
    %v523 = vand.u32 %v522, 4294901760
    %v524 = vsub.f32 %v522, %v523
    %v525 = vand.u32 %v524, 4294901760
    %526 = vmatpush.msra.mxu0 %v525
    %v527 = vand.u32 %v66, 4294901760
    %v528 = vsub.f32 %v66, %v527
    %v529 = vand.u32 %v528, 4294901760
    %v530 = vsub.f32 %v528, %v529
    %v531 = vand.u32 %v530, 4294901760
    %532 = vmatpush.msra.mxu0 %v531
    %v533 = vand.u32 %v65, 4294901760
    %v534 = vsub.f32 %v65, %v533
    %v535 = vand.u32 %v534, 4294901760
    %v536 = vsub.f32 %v534, %v535
    %v537 = vand.u32 %v536, 4294901760
    %538 = vmatpush.msra.mxu0 %v537
    %v539 = vand.u32 %v64, 4294901760
    %v540 = vsub.f32 %v64, %v539
    %v541 = vand.u32 %v540, 4294901760
    %v542 = vsub.f32 %v540, %v541
    %v543 = vand.u32 %v542, 4294901760
    %544 = vmatpush.msra.mxu0 %v543
    %v545 = vand.u32 %v63, 4294901760
    %v546 = vsub.f32 %v63, %v545
    %v547 = vand.u32 %v546, 4294901760
    %v548 = vsub.f32 %v546, %v547
    %v549 = vand.u32 %v548, 4294901760
    %550 = vmatpush.msra.mxu0 %v549
    %v551 = vand.u32 %v62, 4294901760
    %v552 = vsub.f32 %v62, %v551
    %v553 = vand.u32 %v552, 4294901760
    %v554 = vsub.f32 %v552, %v553
    %v555 = vand.u32 %v554, 4294901760
    %556 = vmatpush.msra.mxu0 %v555
    %v557 = vand.u32 %v419, 4294901760
    %558 = vmatmul.f32.gmra.mxu0 %v557
    %v559 = vpop.f32.mrf.mxu0
    %v560 = vadd.f32 %v459, %v559
    %561 = vdwg.mxu0
    %v562 = vand.u32 %v77, 4294901760
    %v563 = vsub.f32 %v77, %v562
    %564 = vmatpush.msra.mxu0 %v563
    %v565 = vand.u32 %v76, 4294901760
    %v566 = vsub.f32 %v76, %v565
    %567 = vmatpush.msra.mxu0 %v566
    %v568 = vand.u32 %v75, 4294901760
    %v569 = vsub.f32 %v75, %v568
    %570 = vmatpush.msra.mxu0 %v569
    %v571 = vand.u32 %v74, 4294901760
    %v572 = vsub.f32 %v74, %v571
    %573 = vmatpush.msra.mxu0 %v572
    %v574 = vand.u32 %v73, 4294901760
    %v575 = vsub.f32 %v73, %v574
    %576 = vmatpush.msra.mxu0 %v575
    %v577 = vand.u32 %v72, 4294901760
    %v578 = vsub.f32 %v72, %v577
    %579 = vmatpush.msra.mxu0 %v578
    %v580 = vand.u32 %v71, 4294901760
    %v581 = vsub.f32 %v71, %v580
    %582 = vmatpush.msra.mxu0 %v581
    %v583 = vand.u32 %v70, 4294901760
    %v584 = vsub.f32 %v70, %v583
    %585 = vmatpush.msra.mxu0 %v584
    %v586 = vand.u32 %v69, 4294901760
    %v587 = vsub.f32 %v69, %v586
    %588 = vmatpush.msra.mxu0 %v587
    %v589 = vand.u32 %v68, 4294901760
    %v590 = vsub.f32 %v68, %v589
    %591 = vmatpush.msra.mxu0 %v590
    %v592 = vand.u32 %v67, 4294901760
    %v593 = vsub.f32 %v67, %v592
    %594 = vmatpush.msra.mxu0 %v593
    %v595 = vand.u32 %v66, 4294901760
    %v596 = vsub.f32 %v66, %v595
    %597 = vmatpush.msra.mxu0 %v596
    %v598 = vand.u32 %v65, 4294901760
    %v599 = vsub.f32 %v65, %v598
    %600 = vmatpush.msra.mxu0 %v599
    %v601 = vand.u32 %v64, 4294901760
    %v602 = vsub.f32 %v64, %v601
    %603 = vmatpush.msra.mxu0 %v602
    %v604 = vand.u32 %v63, 4294901760
    %v605 = vsub.f32 %v63, %v604
    %606 = vmatpush.msra.mxu0 %v605
    %v607 = vand.u32 %v62, 4294901760
    %v608 = vsub.f32 %v62, %v607
    %609 = vmatpush.msra.mxu0 %v608
    %v610 = vand.u32 %v419, 4294901760
    %v611 = vsub.f32 %v419, %v610
    %612 = vmatmul.f32.gmra.mxu0 %v611
    %v613 = vpop.f32.mrf.mxu0
    %v614 = vadd.f32 %v560, %v613
    %615 = vdwg.mxu0
    %v616 = vand.u32 %v77, 4294901760
    %617 = vmatpush.msra.mxu0 %v616
    %v618 = vand.u32 %v76, 4294901760
    %619 = vmatpush.msra.mxu0 %v618
    %v620 = vand.u32 %v75, 4294901760
    %621 = vmatpush.msra.mxu0 %v620
    %v622 = vand.u32 %v74, 4294901760
    %623 = vmatpush.msra.mxu0 %v622
    %v624 = vand.u32 %v73, 4294901760
    %625 = vmatpush.msra.mxu0 %v624
    %v626 = vand.u32 %v72, 4294901760
    %627 = vmatpush.msra.mxu0 %v626
    %v628 = vand.u32 %v71, 4294901760
    %629 = vmatpush.msra.mxu0 %v628
    %v630 = vand.u32 %v70, 4294901760
    %631 = vmatpush.msra.mxu0 %v630
    %v632 = vand.u32 %v69, 4294901760
    %633 = vmatpush.msra.mxu0 %v632
    %v634 = vand.u32 %v68, 4294901760
    %635 = vmatpush.msra.mxu0 %v634
    %v636 = vand.u32 %v67, 4294901760
    %637 = vmatpush.msra.mxu0 %v636
    %v638 = vand.u32 %v66, 4294901760
    %639 = vmatpush.msra.mxu0 %v638
    %v640 = vand.u32 %v65, 4294901760
    %641 = vmatpush.msra.mxu0 %v640
    %v642 = vand.u32 %v64, 4294901760
    %643 = vmatpush.msra.mxu0 %v642
    %v644 = vand.u32 %v63, 4294901760
    %645 = vmatpush.msra.mxu0 %v644
    %v646 = vand.u32 %v62, 4294901760
    %647 = vmatpush.msra.mxu0 %v646
    %v648 = vand.u32 %v419, 4294901760
    %v649 = vsub.f32 %v419, %v648
    %v650 = vand.u32 %v649, 4294901760
    %651 = vmatmul.f32.gmra.mxu0 %v650
    %v652 = vpop.f32.mrf.mxu0
    %v653 = vadd.f32 %v614, %v652
    %654 = vdwg.mxu0
    %v655 = vand.u32 %v77, 4294901760
    %v656 = vsub.f32 %v77, %v655
    %v657 = vand.u32 %v656, 4294901760
    %658 = vmatpush.msra.mxu0 %v657
    %v659 = vand.u32 %v76, 4294901760
    %v660 = vsub.f32 %v76, %v659
    %v661 = vand.u32 %v660, 4294901760
    %662 = vmatpush.msra.mxu0 %v661
    %v663 = vand.u32 %v75, 4294901760
    %v664 = vsub.f32 %v75, %v663
    %v665 = vand.u32 %v664, 4294901760
    %666 = vmatpush.msra.mxu0 %v665
    %v667 = vand.u32 %v74, 4294901760
    %v668 = vsub.f32 %v74, %v667
    %v669 = vand.u32 %v668, 4294901760
    %670 = vmatpush.msra.mxu0 %v669
    %v671 = vand.u32 %v73, 4294901760
    %v672 = vsub.f32 %v73, %v671
    %v673 = vand.u32 %v672, 4294901760
    %674 = vmatpush.msra.mxu0 %v673
    %v675 = vand.u32 %v72, 4294901760
    %v676 = vsub.f32 %v72, %v675
    %v677 = vand.u32 %v676, 4294901760
    %678 = vmatpush.msra.mxu0 %v677
    %v679 = vand.u32 %v71, 4294901760
    %v680 = vsub.f32 %v71, %v679
    %v681 = vand.u32 %v680, 4294901760
    %682 = vmatpush.msra.mxu0 %v681
    %v683 = vand.u32 %v70, 4294901760
    %v684 = vsub.f32 %v70, %v683
    %v685 = vand.u32 %v684, 4294901760
    %686 = vmatpush.msra.mxu0 %v685
    %v687 = vand.u32 %v69, 4294901760
    %v688 = vsub.f32 %v69, %v687
    %v689 = vand.u32 %v688, 4294901760
    %690 = vmatpush.msra.mxu0 %v689
    %v691 = vand.u32 %v68, 4294901760
    %v692 = vsub.f32 %v68, %v691
    %v693 = vand.u32 %v692, 4294901760
    %694 = vmatpush.msra.mxu0 %v693
    %v695 = vand.u32 %v67, 4294901760
    %v696 = vsub.f32 %v67, %v695
    %v697 = vand.u32 %v696, 4294901760
    %698 = vmatpush.msra.mxu0 %v697
    %v699 = vand.u32 %v66, 4294901760
    %v700 = vsub.f32 %v66, %v699
    %v701 = vand.u32 %v700, 4294901760
    %702 = vmatpush.msra.mxu0 %v701
    %v703 = vand.u32 %v65, 4294901760
    %v704 = vsub.f32 %v65, %v703
    %v705 = vand.u32 %v704, 4294901760
    %706 = vmatpush.msra.mxu0 %v705
    %v707 = vand.u32 %v64, 4294901760
    %v708 = vsub.f32 %v64, %v707
    %v709 = vand.u32 %v708, 4294901760
    %710 = vmatpush.msra.mxu0 %v709
    %v711 = vand.u32 %v63, 4294901760
    %v712 = vsub.f32 %v63, %v711
    %v713 = vand.u32 %v712, 4294901760
    %714 = vmatpush.msra.mxu0 %v713
    %v715 = vand.u32 %v62, 4294901760
    %v716 = vsub.f32 %v62, %v715
    %v717 = vand.u32 %v716, 4294901760
    %718 = vmatpush.msra.mxu0 %v717
    %v719 = vand.u32 %v419, 4294901760
    %720 = vmatmul.f32.gmra.mxu0 %v719
    %v721 = vpop.f32.mrf.mxu0
    %v722 = vadd.f32 %v653, %v721
    %723 = vdwg.mxu0
    %v724 = vand.u32 %v77, 4294901760
    %725 = vmatpush.msra.mxu0 %v724
    %v726 = vand.u32 %v76, 4294901760
    %727 = vmatpush.msra.mxu0 %v726
    %v728 = vand.u32 %v75, 4294901760
    %729 = vmatpush.msra.mxu0 %v728
    %v730 = vand.u32 %v74, 4294901760
    %731 = vmatpush.msra.mxu0 %v730
    %v732 = vand.u32 %v73, 4294901760
    %733 = vmatpush.msra.mxu0 %v732
    %v734 = vand.u32 %v72, 4294901760
    %735 = vmatpush.msra.mxu0 %v734
    %v736 = vand.u32 %v71, 4294901760
    %737 = vmatpush.msra.mxu0 %v736
    %v738 = vand.u32 %v70, 4294901760
    %739 = vmatpush.msra.mxu0 %v738
    %v740 = vand.u32 %v69, 4294901760
    %741 = vmatpush.msra.mxu0 %v740
    %v742 = vand.u32 %v68, 4294901760
    %743 = vmatpush.msra.mxu0 %v742
    %v744 = vand.u32 %v67, 4294901760
    %745 = vmatpush.msra.mxu0 %v744
    %v746 = vand.u32 %v66, 4294901760
    %747 = vmatpush.msra.mxu0 %v746
    %v748 = vand.u32 %v65, 4294901760
    %749 = vmatpush.msra.mxu0 %v748
    %v750 = vand.u32 %v64, 4294901760
    %751 = vmatpush.msra.mxu0 %v750
    %v752 = vand.u32 %v63, 4294901760
    %753 = vmatpush.msra.mxu0 %v752
    %v754 = vand.u32 %v62, 4294901760
    %755 = vmatpush.msra.mxu0 %v754
    %v756 = vand.u32 %v419, 4294901760
    %757 = vmatmul.f32.gmra.mxu0 %v756
    %v758 = vpop.f32.mrf.mxu0
    %v759 = vadd.f32 %v722, %v758
    %760 = vdwg.mxu0
    %v761 = vmul.f32 %v417, 0.03125
    %v762 = vmul.f32 %v417, %v761
    %v763 = vsub.f32 %v759, %v762
    %v764 = vmax.f32 %v763, 0.0
    %v765 = vmul.f32 %v764, 0.032258064
    %v766 = vrsqrt.pop %v765
    %v767 = vmul.f32 %v766, %v765
    %v768 = vmul.f32 %v767, %v766
    %v769 = vmul.f32 0.5, %v768
    %v770 = vsub.f32 1.5, %v769
    %v771 = vmul.f32 %v766, %v770
    %v772 = vmul.f32 %v765, %v771
    %vm773 = vcmp.eq.f32.partialorder %v765, inf
    %v774 = vsel %vm773, %v765, %v772
    %vm775 = vcmp.eq.f32.partialorder %v765, 0.0
    %v776 = vand.u32 %v765, 2147483648
    %v777 = vsel %vm775, %v776, %v774
    %v778 = vadd.f32 %v777, 1e-06
    %v779 = vrcp.pop %v778
    %v780 = vmul.f32 %v778, %v779
    %v781 = vsub.f32 1.0, %v780
    %v782 = vmul.f32 %v779, %v781
    %v783 = vadd.f32 %v779, %v782
    %vm784 = vweird.f32 %v778
    %vm785 = vweird.f32 %v779
    %vm786 = vmor %vm784, %vm785
    %v787 = vsel %vm786, %v779, %v783
    %v788 = vand.u32 2147483647, %v778
    %vm789 = vcmp.eq.f32.partialorder %v788, 8.507059e+37
    %v790 = vand.u32 %v778, 2147483648
    %v791 = vor.u32 1.1754944e-38, %v790
    %v792 = vsel %vm789, %v791, %v787
    %v793 = vld [vmem:[#allocation5] sm:$0x1]
    %v794 = vld [vmem:[%s2] sm:$0x1]
    %v795 = vsub.f32 %v61, %v761
    %v796 = vmul.f32 %v795, %v792
    %v798 = vperm.slane %v793, 0
    %v800 = vmul.f32 %v796, %v798
    %v802 = vperm.slane %v794, 0
    %v804 = vadd.f32 %v800, %v802
    %805 = vst [vmem:[#allocation8] sm:$0xff] %v804
    // Predicated region
    $region30: #{tpu_custom_call.1} parent=1 // pred_check
      _
    $region31: #{tpu_custom_call.1} parent=1 // pred_check_branch
      %807 = sbr.rel (0) target = $region33
    $region32: #{tpu_custom_call.1} parent=1 // pred_region
      %809 = vsyncadd [#allocation4], 0
      %s811 = sshll.u32 [#allocation8], 4
      %s812 = int_to_ptr.vmem [resolvable:$true] %s811
      %s813 = sshll.u32 %s4, 4
      %s814 = int_to_ptr.hbm [resolvable:$true] %s813
      %816 = dma.vmem_to_hbm [thread:$0]  %s812, 128, %s814, [#allocation4]
    $region33: #{tpu_custom_call.1} parent=1 // pred_fallthru
      _
    // Predicated region
    $region34: #{tpu_custom_call.1} parent=1 // pred_check
      _
    $region35: #{tpu_custom_call.1} parent=1 // pred_check_branch
      %818 = sbr.rel (0) target = $region37
    $region36: #{tpu_custom_call.1} parent=1 // pred_region
      %820 = dma.done [#allocation4], 128
    $region37: #{tpu_custom_call.1} parent=1 // pred_fallthru
      _
    %821 = vsyncpa [#allocation3], 1
    %822 = vsyncpa [#allocation6], 1
    %823 = vsyncpa [#allocation4], 1

// kernel: tpu_custom_call.1
$region0: #{tpu_custom_call.1}
  #allocation0 [shape = 'u32[]', space=smem, size = 0x4, offset = 0x4, fixed_abs, tag = 'smem constant byte address 0x4 - core index']
  #allocation1 [shape = 'u32[72,128]{1,0:T(1,128)}', space=vmem, size = 0x9000, scoped, tag = 'internal scratch']
  %s0 = inlined_call_operand.hbm [shape: f32[32,32], index: 0, kind: input, shape index: {}]
  %s1 = inlined_call_operand.hbm [shape: f32[1,32], index: 1, kind: input, shape index: {}]
  %s2 = inlined_call_operand.vmem [shape: f32[1,32], index: 2, kind: input, shape index: {}]
  %s3 = inlined_call_operand.hbm [shape: f32[32,32], index: 3, kind: output, shape index: {}]
  %s4 = sld [smem:[#allocation0]]
  $region53: #{tpu_custom_call.1} parent=0
    _
  %s6 = ssub.s32 1, %s4
  %s7 = scalar_select 0, %s6, %s4
  $region1: #{tpu_custom_call.1} parent=0
    #allocation2 [shape = 'u8[16384]{0}', space=vmem, size = 0x4000, scoped, tag = 'input window, operand 0']
    #allocation3 [shape = 's32[2]{0}', space=sflag, size = 0x8, scoped, tag = 'scoped memory for tpu_custom_call.1']
    #allocation4 [shape = 's32[2]{0}', space=sflag, size = 0x8, scoped, tag = 'scoped memory for tpu_custom_call.1']
    #allocation5 [shape = 'u8[512]{0}', space=vmem, size = 0x400, scoped, tag = 'input window, operand 1, single buffered']
    #allocation6 [shape = 's32[1]{0}', space=sflag, size = 0x4, scoped, tag = 'scoped memory for tpu_custom_call.1']
    #allocation7 [shape = 'u8[16384]{0}', space=vmem, size = 0x4000, scoped, tag = 'output window, operand 0']
    %8 = vsyncpa [#allocation3], 0
    %s9 = scalar_lea.sflag [#allocation3], 1
    %10 = vsyncpa %s9, 0
    %11 = vsyncpa [#allocation6], 0
    %12 = vsyncpa [#allocation4], 0
    %s13 = scalar_lea.sflag [#allocation4], 1
    %14 = vsyncpa %s13, 0
    loop: start=0, step=1, limit=4
    $region2: #{tpu_custom_call.1} parent=1 // loop_pre_header
      _
    $region3: #{tpu_custom_call.1} parent=1 // loop_header
      %s16 = sphi 0, %s20
      %p17 = scmp.ge.s32.totalorder %s16, 4
      %s26 = sphi 0, %s28
      %s29 = sphi 0, %s26
      %s30 = sphi 0, %s29
      %s46 = sphi 0, %s30
      %s50 = sphi 0, %s50
      %s52 = sphi 0, %s50
      %s53 = sphi 0, %s52
      %s67 = sphi 0, %s53
      %s71 = sphi 0, %s71
      %s73 = sphi 0, %s71
      %s74 = sphi 0, %s73
      %s88 = sphi 0, %s74
      %s94 = sphi 0, %s96
      %s97 = sphi 0, %s94
      %s98 = sphi 0, %s97
      %s114 = sphi 0, %s98
    $region4: #{tpu_custom_call.1} parent=1 // loop_header_branch
      %19 = sbr.rel (%p17) target = $region8
    $region5: #{tpu_custom_call.1} parent=1 // loop_body
      %s21 = ssub.s32 %s16, 1
      %s22 = ssub.s32 %s16, 2
      %s23 = sadd.s32 %s16, 1
      %s24 = ssub.s32 %s16, %s23
      %p25 = scmp.eq.s32.totalorder %s24, 0
      %s27 = sadd.s32 %s26, 1
      %s28 = scalar_select %p25, %s26, %s27
      %p31 = pneg %p25
      %p32 = scmp.eq.s32.totalorder %s16, 1
      %p33 = por %p31, %p32
      %p34 = scmp.ne.s32.totalorder %s26, %s29
      %p35 = scmp.eq.s32.totalorder %s16, 0
      %p36 = por %p34, %p35
      %p37 = scmp.ne.s32.totalorder %s26, %s29
      %p38 = scmp.eq.s32.totalorder %s21, 1
      %p39 = por %p37, %p38
      %p40 = scmp.ne.s32.totalorder %s29, %s30
      %p41 = scmp.eq.s32.totalorder %s21, 0
      %p42 = por %p40, %p41
      %p43 = scmp.ne.s32.totalorder %s29, %s30
      %p44 = scmp.eq.s32.totalorder %s22, 1
      %p45 = por %p43, %p44
      %p47 = scmp.ne.s32.totalorder %s30, %s46
      %p48 = scmp.eq.s32.totalorder %s22, 0
      %p49 = por %p47, %p48
      %s51 = sadd.s32 %s50, 1
      %p54 = scmp.eq.s32.totalorder %s16, 1
      %p55 = scmp.ne.s32.totalorder %s50, %s52
      %p56 = scmp.eq.s32.totalorder %s16, 0
      %p57 = por %p55, %p56
      %p58 = scmp.ne.s32.totalorder %s50, %s52
      %p59 = scmp.eq.s32.totalorder %s21, 1
      %p60 = por %p58, %p59
      %p61 = scmp.ne.s32.totalorder %s52, %s53
      %p62 = scmp.eq.s32.totalorder %s21, 0
      %p63 = por %p61, %p62
      %p64 = scmp.ne.s32.totalorder %s52, %s53
      %p65 = scmp.eq.s32.totalorder %s22, 1
      %p66 = por %p64, %p65
      %p68 = scmp.ne.s32.totalorder %s53, %s67
      %p69 = scmp.eq.s32.totalorder %s22, 0
      %p70 = por %p68, %p69
      %s72 = sadd.s32 %s71, 1
      %p75 = scmp.eq.s32.totalorder %s16, 1
      %p76 = scmp.ne.s32.totalorder %s71, %s73
      %p77 = scmp.eq.s32.totalorder %s16, 0
      %p78 = por %p76, %p77
      %p79 = scmp.ne.s32.totalorder %s71, %s73
      %p80 = scmp.eq.s32.totalorder %s21, 1
      %p81 = por %p79, %p80
      %p82 = scmp.ne.s32.totalorder %s73, %s74
      %p83 = scmp.eq.s32.totalorder %s21, 0
      %p84 = por %p82, %p83
      %p85 = scmp.ne.s32.totalorder %s73, %s74
      %p86 = scmp.eq.s32.totalorder %s22, 1
      %p87 = por %p85, %p86
      %p89 = scmp.ne.s32.totalorder %s74, %s88
      %p90 = scmp.eq.s32.totalorder %s22, 0
      %p91 = por %p89, %p90
      %s92 = ssub.s32 %s16, %s23
      %p93 = scmp.eq.s32.totalorder %s92, 0
      %s95 = sadd.s32 %s94, 1
      %s96 = scalar_select %p93, %s94, %s95
      %p99 = pneg %p93
      %p100 = scmp.eq.s32.totalorder %s16, 1
      %p101 = por %p99, %p100
      %p102 = scmp.ne.s32.totalorder %s94, %s97
      %p103 = scmp.eq.s32.totalorder %s16, 0
      %p104 = por %p102, %p103
      %p105 = scmp.ne.s32.totalorder %s94, %s97
      %p106 = scmp.eq.s32.totalorder %s21, 1
      %p107 = por %p105, %p106
      %p108 = scmp.ne.s32.totalorder %s97, %s98
      %p109 = scmp.eq.s32.totalorder %s21, 0
      %p110 = por %p108, %p109
      %p111 = scmp.ne.s32.totalorder %s97, %s98
      %p112 = scmp.eq.s32.totalorder %s22, 1
      %p113 = por %p111, %p112
      %p115 = scmp.ne.s32.totalorder %s98, %s114
      %p116 = scmp.eq.s32.totalorder %s22, 0
      %p117 = por %p115, %p116
      %p118 = scmp.le.s32.totalorder 1, %s16
      %p119 = scmp.lt.s32.totalorder %s16, 3
      %p120 = pnand %p118, %p119
      %p121 = pneg %p120
      // Predicated region
      $region9: #{tpu_custom_call.1} parent=5 // pred_check
        _
      $region10: #{tpu_custom_call.1} parent=5 // pred_check_branch
        %123 = sbr.rel (%p120) target = $region12
      $region11: #{tpu_custom_call.1} parent=5 // pred_region
        %s124 = ssub.s32 %s16, 1
        // Predicated region
        $region13: #{tpu_custom_call.1} parent=11 // pred_check
          %p125 = pneg %p63
        $region14: #{tpu_custom_call.1} parent=11 // pred_check_branch
          %127 = sbr.rel (%p125) target = $region16
        $region15: #{tpu_custom_call.1} parent=11 // pred_region
          %129 = vsyncadd [#allocation6], 0
          %s131 = sshll.u32 %s1, 4
          %s132 = int_to_ptr.hbm [resolvable:$true] %s131
          %s133 = sshll.u32 [#allocation5], 4
          %s134 = int_to_ptr.vmem [resolvable:$true] %s133
          %136 = dma.hbm_to_vmem [thread:$0]  %s132, 16, %s134, [#allocation6]
        $region16: #{tpu_custom_call.1} parent=11 // pred_fallthru
          _
        // Predicated region
        $region17: #{tpu_custom_call.1} parent=11 // pred_check
          %p137 = pneg %p84
        $region18: #{tpu_custom_call.1} parent=11 // pred_check_branch
          %139 = sbr.rel (%p137) target = $region20
        $region19: #{tpu_custom_call.1} parent=11 // pred_region
          _
        $region20: #{tpu_custom_call.1} parent=11 // pred_fallthru
          _
      $region12: #{tpu_custom_call.1} parent=5 // pred_fallthru
        _
      %p140 = scmp.lt.s32.totalorder %s16, 2
      // Predicated region
      $region21: #{tpu_custom_call.1} parent=5 // pred_check
        %p141 = pneg %p140
      $region22: #{tpu_custom_call.1} parent=5 // pred_check_branch
        %143 = sbr.rel (%p141) target = $region24
      $region23: #{tpu_custom_call.1} parent=5 // pred_region
        // Predicated region
        $region25: #{tpu_custom_call.1} parent=23 // pred_check
          %p144 = pneg %p36
        $region26: #{tpu_custom_call.1} parent=23 // pred_check_branch
          %146 = sbr.rel (%p144) target = $region28
        $region27: #{tpu_custom_call.1} parent=23 // pred_region
          %s147 = sand.u32 %s26, 1
          %s148 = scalar_lea.sflag [#allocation3], %s147
          %s149 = sand.u32 %s26, 1
          %s150 = smul.addr %s149, 16
          %s151 = scalar_lea.vmem [#allocation2], %s150
          %s152 = smul.u32 2, %s16
          %154 = vsyncadd %s148, 0
          %s155 = smul.addr %s152, 8
          %s156 = scalar_lea.hbm %s0, %s155
          %s157 = sshll.u32 %s156, 4
          %s158 = int_to_ptr.hbm [resolvable:$true] %s157
          %s159 = sshll.u32 %s151, 4
          %s160 = int_to_ptr.vmem [resolvable:$true] %s159
          %165 = dma.hbm_to_vmem [thread:$0]  %s158, 256, %s160, %s148, 128, 128, 8
        $region28: #{tpu_custom_call.1} parent=23 // pred_fallthru
          _
      $region24: #{tpu_custom_call.1} parent=5 // pred_fallthru
        _
      %p166 = scmp.le.s32.totalorder 1, %s16
      %p167 = scmp.lt.s32.totalorder %s16, 3
      %p168 = pnand %p166, %p167
      %p169 = pneg %p168
      // Predicated region
      $region29: #{tpu_custom_call.1} parent=5 // pred_check
        _
      $region30: #{tpu_custom_call.1} parent=5 // pred_check_branch
        %171 = sbr.rel (%p168) target = $region32
      $region31: #{tpu_custom_call.1} parent=5 // pred_region
        %s172 = ssub.s32 %s16, 1
        %s173 = sand.u32 %s29, 1
        %s174 = scalar_lea.sflag [#allocation3], %s173
        %s175 = sand.u32 %s29, 1
        %s176 = smul.addr %s175, 16
        %s177 = scalar_lea.vmem [#allocation2], %s176
        // Predicated region
        $region33: #{tpu_custom_call.1} parent=31 // pred_check
          %p178 = pneg %p42
        $region34: #{tpu_custom_call.1} parent=31 // pred_check_branch
          %180 = sbr.rel (%p178) target = $region36
        $region35: #{tpu_custom_call.1} parent=31 // pred_region
          %182 = dma.done %s174, 256
        $region36: #{tpu_custom_call.1} parent=31 // pred_fallthru
          _
        // Predicated region
        $region37: #{tpu_custom_call.1} parent=31 // pred_check
          %p183 = pneg %p63
        $region38: #{tpu_custom_call.1} parent=31 // pred_check_branch
          %185 = sbr.rel (%p183) target = $region40
        $region39: #{tpu_custom_call.1} parent=31 // pred_region
          %187 = dma.done [#allocation6], 16
        $region40: #{tpu_custom_call.1} parent=31 // pred_fallthru
          _
        %s188 = sand.u32 %s29, 1
        %s189 = scalar_lea.sflag [#allocation3], %s188
        %s190 = sand.u32 %s29, 1
        %s191 = smul.addr %s190, 16
        %s192 = scalar_lea.vmem [#allocation2], %s191
        %p193 = pneg %p42
        %p194 = pneg %p39
        %p195 = pneg %p63
        %p196 = pneg %p60
        %p197 = pneg %p84
        %p198 = pneg %p81
        %p199 = pneg %p110
        %p200 = pneg %p107
        %s201 = sand.u32 %s97, 1
        %s202 = scalar_lea.sflag [#allocation4], %s201
        %s203 = sand.u32 %s97, 1
        %s204 = smul.addr %s203, 16
        %s205 = scalar_lea.vmem [#allocation7], %s204
        %s206 = smul.u32 2, %s21
        %s207 = smul.u32 2, %s21
        %v208 = vld [vmem:[%s177] sm:$0xff]
        %v209 = vld [vmem:[%s177 + $0x8] sm:$0xff]
        %vm210 = vcmask 261120
        %v211 = vsel %vm210, %v208, 0.0
        %212 = vadd.xlane.f32.xlu0 %v211
        %v213 = vpop.xlane.xlu0 %212
        %v214 = vsel %vm210, %v209, 0.0
        %215 = vadd.xlane.f32.xlu0 %v214
        %v216 = vpop.xlane.xlu0 %215
        %v217 = vmul.f32 %v208, %v208
        %v218 = vmul.f32 %v209, %v209
        %v219 = vsel %vm210, %v217, 0.0
        %220 = vadd.xlane.f32.xlu0 %v219
        %v221 = vpop.xlane.xlu0 %220
        %v222 = vsel %vm210, %v218, 0.0
        %223 = vadd.xlane.f32.xlu0 %v222
        %v224 = vpop.xlane.xlu0 %223
        %v225 = vmul.f32 %v213, 0.03125
        %v226 = vmul.f32 %v216, 0.03125
        %v227 = vmul.f32 %v213, %v225
        %v228 = vmul.f32 %v216, %v226
        %v229 = vsub.f32 %v221, %v227
        %v230 = vsub.f32 %v224, %v228
        %v231 = vmax.f32 %v229, 0.0
        %v232 = vmax.f32 %v230, 0.0
        %v233 = vmul.f32 %v231, 0.032258064
        %v234 = vmul.f32 %v232, 0.032258064
        %v235 = vrsqrt.pop %v233
        %v236 = vmul.f32 %v235, %v233
        %v237 = vmul.f32 %v236, %v235
        %v238 = vmul.f32 0.5, %v237
        %v239 = vsub.f32 1.5, %v238
        %v240 = vmul.f32 %v235, %v239
        %v241 = vmul.f32 %v233, %v240
        %vm242 = vcmp.eq.f32.partialorder %v233, inf
        %v243 = vsel %vm242, %v233, %v241
        %vm244 = vcmp.eq.f32.partialorder %v233, 0.0
        %v245 = vand.u32 %v233, 2147483648
        %v246 = vsel %vm244, %v245, %v243
        %v247 = vrsqrt.pop %v234
        %v248 = vmul.f32 %v247, %v234
        %v249 = vmul.f32 %v248, %v247
        %v250 = vmul.f32 0.5, %v249
        %v251 = vsub.f32 1.5, %v250
        %v252 = vmul.f32 %v247, %v251
        %v253 = vmul.f32 %v234, %v252
        %vm254 = vcmp.eq.f32.partialorder %v234, inf
        %v255 = vsel %vm254, %v234, %v253
        %vm256 = vcmp.eq.f32.partialorder %v234, 0.0
        %v257 = vand.u32 %v234, 2147483648
        %v258 = vsel %vm256, %v257, %v255
        %v259 = vadd.f32 %v246, 1e-06
        %v260 = vadd.f32 %v258, 1e-06
        %v261 = vrcp.pop %v259
        %v262 = vmul.f32 %v259, %v261
        %v263 = vsub.f32 1.0, %v262
        %v264 = vmul.f32 %v261, %v263
        %v265 = vadd.f32 %v261, %v264
        %vm266 = vweird.f32 %v259
        %vm267 = vweird.f32 %v261
        %vm268 = vmor %vm266, %vm267
        %v269 = vsel %vm268, %v261, %v265
        %v270 = vand.u32 2147483647, %v259
        %vm271 = vcmp.eq.f32.partialorder %v270, 8.507059e+37
        %v272 = vand.u32 %v259, 2147483648
        %v273 = vor.u32 1.1754944e-38, %v272
        %v274 = vsel %vm271, %v273, %v269
        %v275 = vrcp.pop %v260
        %v276 = vmul.f32 %v260, %v275
        %v277 = vsub.f32 1.0, %v276
        %v278 = vmul.f32 %v275, %v277
        %v279 = vadd.f32 %v275, %v278
        %vm280 = vweird.f32 %v260
        %vm281 = vweird.f32 %v275
        %vm282 = vmor %vm280, %vm281
        %v283 = vsel %vm282, %v275, %v279
        %v284 = vand.u32 2147483647, %v260
        %vm285 = vcmp.eq.f32.partialorder %v284, 8.507059e+37
        %v286 = vand.u32 %v260, 2147483648
        %v287 = vor.u32 1.1754944e-38, %v286
        %v288 = vsel %vm285, %v287, %v283
        %v289 = vld [vmem:[#allocation5] sm:$0x1]
        %v290 = vld [vmem:[%s2] sm:$0x1]
        %v291 = vsub.f32 %v208, %v225
        %v292 = vsub.f32 %v209, %v226
        %v293 = vmul.f32 %v291, %v274
        %v294 = vmul.f32 %v292, %v288
        %v296 = vperm.slane %v289, 0
        %v298 = vmul.f32 %v293, %v296
        %v299 = vmul.f32 %v294, %v296
        %v301 = vperm.slane %v290, 0
        %v303 = vadd.f32 %v298, %v301
        %v304 = vadd.f32 %v299, %v301
        %305 = vst.msk [vmem:[%s205] sm:$0xff] %vm210, %v303
        %306 = vst.msk [vmem:[%s205 + $0x8] sm:$0xff] %vm210, %v304
        %s307 = sand.u32 %s97, 1
        %s308 = scalar_lea.sflag [#allocation4], %s307
        %s309 = sand.u32 %s97, 1
        %s310 = smul.addr %s309, 16
        %s311 = scalar_lea.vmem [#allocation7], %s310
        // Predicated region
        $region41: #{tpu_custom_call.1} parent=31 // pred_check
          %p312 = pneg %p107
        $region42: #{tpu_custom_call.1} parent=31 // pred_check_branch
          %314 = sbr.rel (%p312) target = $region44
        $region43: #{tpu_custom_call.1} parent=31 // pred_region
          %s315 = smul.u32 2, %s21
          %317 = vsyncadd %s308, 0
          %s318 = smul.addr %s315, 8
          %s319 = scalar_lea.hbm %s3, %s318
          %s320 = sshll.u32 %s311, 4
          %s321 = int_to_ptr.vmem [resolvable:$true] %s320
          %s322 = sshll.u32 %s319, 4
          %s323 = int_to_ptr.hbm [resolvable:$true] %s322
          %328 = dma.vmem_to_hbm [thread:$0]  %s321, 256, %s323, %s308, 128, 128, 8
        $region44: #{tpu_custom_call.1} parent=31 // pred_fallthru
          _
      $region32: #{tpu_custom_call.1} parent=5 // pred_fallthru
        _
      %p329 = scmp.le.s32.totalorder 2, %s16
      // Predicated region
      $region45: #{tpu_custom_call.1} parent=5 // pred_check
        %p330 = pneg %p329
      $region46: #{tpu_custom_call.1} parent=5 // pred_check_branch
        %332 = sbr.rel (%p330) target = $region48
      $region47: #{tpu_custom_call.1} parent=5 // pred_region
        %s333 = ssub.s32 %s16, 2
        // Predicated region
        $region49: #{tpu_custom_call.1} parent=47 // pred_check
          %p334 = pneg %p113
        $region50: #{tpu_custom_call.1} parent=47 // pred_check_branch
          %336 = sbr.rel (%p334) target = $region52
        $region51: #{tpu_custom_call.1} parent=47 // pred_region
          %s337 = sand.u32 %s98, 1
          %s338 = scalar_lea.sflag [#allocation4], %s337
          %s339 = sand.u32 %s98, 1
          %s340 = smul.addr %s339, 16
          %s341 = scalar_lea.vmem [#allocation7], %s340
          %343 = dma.done %s338, 256
        $region52: #{tpu_custom_call.1} parent=47 // pred_fallthru
          _
      $region48: #{tpu_custom_call.1} parent=5 // pred_fallthru
        _
    $region6: #{tpu_custom_call.1} parent=1 // loop_footer
      %s20 = sadd.s32 1, %s16
    $region7: #{tpu_custom_call.1} parent=1 // loop_footer_branch
      %15 = sbr.rel target = $region3
    $region8: #{tpu_custom_call.1} parent=1 // loop_exit
      _
    %344 = vsyncpa [#allocation3], 1
    %s345 = scalar_lea.sflag [#allocation3], 1
    %346 = vsyncpa %s345, 1
    %347 = vsyncpa [#allocation6], 1
    %348 = vsyncpa [#allocation4], 1
    %s349 = scalar_lea.sflag [#allocation4], 1
    %350 = vsyncpa %s349, 1

</llo_original>
